<compile_context>
chip_gen: v5e
topology: v5e:2x2
jax: 0.10.0
libtpu: 0.0.40
codegen_flags: <defaults>
</compile_context>

<pallas_src>
import functools

import jax
import jax.numpy as jnp
from jax.experimental import pallas as pl
from jax.experimental.pallas import tpu as pltpu

_LANES = 128
_TARGET_BLOCK_BYTES = 2 * 1024 * 1024  # per-input HBM bytes per grid step


def _round_up(x, m):
    return ((x + m - 1) // m) * m


def _combined_loss_kernel(o_ref, t_ref, sq_ref, ab_ref, mx_ref, *,
                          block_rows, rows, blocks_per_split, needs_mask,
                          num_full_blocks):
    k = pl.program_id(1)

    @pl.when(k == 0)
    def _init():
        # Fresh partials for this split.  |d| >= 0 so 0 is a valid max identity.
        sq_ref[...] = jnp.zeros_like(sq_ref)
        ab_ref[...] = jnp.zeros_like(ab_ref)
        mx_ref[...] = jnp.zeros_like(mx_ref)

    # Upcast in VMEM (VPU); HBM only ever sees the original dtype.
    d = o_ref[...].astype(jnp.float32) - t_ref[...].astype(jnp.float32)

    def _accumulate(dv):
        ad = jnp.abs(dv)
        sq3 = (dv * dv).reshape(-1, 8, _LANES)   # tiling-aligned reshape: no copy
        ab3 = ad.reshape(-1, 8, _LANES)
        # Leading-axis reductions: pure VPU adds/max into (8,128) vregs -- no
        # XLU work and no block-sized accumulator loads/stores per step.
        sq_ref[...] += jnp.sum(sq3, axis=0)[None]
        ab_ref[...] += jnp.sum(ab3, axis=0)[None]
        mx_ref[...] = jnp.maximum(mx_ref[...], jnp.max(ab3, axis=0)[None])

    if needs_mask:
        j = pl.program_id(0)
        g = j * blocks_per_split + k  # logical global block index

        @pl.when(g < num_full_blocks)
        def _fast():                   # fully-valid blocks: no mask cost
            _accumulate(d)

        @pl.when(g >= num_full_blocks)
        def _masked():                 # last (partial / duplicated) block only
            row = jax.lax.broadcasted_iota(jnp.int32, d.shape, 0)
            _accumulate(jnp.where(g * block_rows + row < rows, d, 0.0))
    else:
        _accumulate(d)


def _run_kernel(o2, t2, itemsize):
    """Run the streaming reduction over a (rows, 128) view, rows % 8 == 0."""
    rows = o2.shape[0]

    # ~2 MiB of HBM per input per step (scaled by dtype), rows multiple of 8.
    max_rows = max(8, (_TARGET_BLOCK_BYTES // (_LANES * itemsize)) // 8 * 8)

    if rows <= max_rows:
        num_splits, bps, block_rows = 1, 1, rows
    else:
        num_splits = 2                               # dual-TC split on v7x
        bps = pl.cdiv(pl.cdiv(rows, max_rows), num_splits)
        total = num_splits * bps
        block_rows = _round_up(pl.cdiv(rows, total), 8)  # balanced blocks

    total_slots = num_splits * bps
    num_data_blocks = pl.cdiv(rows, block_rows)
    num_full_blocks = rows // block_rows
    needs_mask = (total_slots * block_rows != rows)

    if total_slots > num_data_blocks:
        # A grid slot may fall entirely past the data (pathological huge-input
        # case).  Clamp its DMA to a valid block; the in-kernel mask (which uses
        # the *logical* block index) zeroes its contribution.
        last = num_data_blocks - 1

        def in_map(j, k, _bps=bps, _last=last):
            return (jnp.minimum(j * _bps + k, _last), 0)
    else:
        def in_map(j, k, _bps=bps):
            return (j * _bps + k, 0)

    kernel = functools.partial(
        _combined_loss_kernel,
        block_rows=block_rows, rows=rows, blocks_per_split=bps,
        needs_mask=needs_mask, num_full_blocks=num_full_blocks)

    part_shape = jax.ShapeDtypeStruct((num_splits, 8, _LANES), jnp.float32)
    part_spec = pl.BlockSpec((1, 8, _LANES), lambda j, k: (j, 0, 0))
    in_spec = pl.BlockSpec((block_rows, _LANES), in_map)

    n_main = rows * _LANES
    cost = pl.CostEstimate(
        flops=7 * n_main,
        transcendentals=0,
        bytes_accessed=2 * n_main * itemsize + 3 * num_splits * 8 * _LANES * 4)

    return pl.pallas_call(
        kernel,
        out_shape=(part_shape, part_shape, part_shape),
        grid_spec=pl.GridSpec(
            grid=(num_splits, bps),
            in_specs=[in_spec, in_spec],
            out_specs=(part_spec, part_spec, part_spec),
        ),
        compiler_params=pltpu.CompilerParams(
            # Split axis shards across TensorCores on v7x; inner axis carries
            # the per-split accumulators.
            dimension_semantics=("parallel", "arbitrary"),
            vmem_limit_bytes=32 * 1024 * 1024,
        ),
        cost_estimate=cost,
    )(o2, t2)


def combined_loss(outputs, targets):
    """0.5 * MSE(o, t) + 0.5 * L1(o, t) + 0.1 * max(|o - t|), as a scalar."""
    assert outputs.shape == targets.shape, "outputs/targets must match in shape"
    n = outputs.size
    assert n > 0

    o = jnp.ravel(outputs)
    t = jnp.ravel(targets)
    itemsize = jnp.dtype(outputs.dtype).itemsize

    # Kernel covers a multiple of 8*128 = 1024 elements; the tiny remainder is
    # handled with plain JAX below -- no whole-array pad/copy is ever emitted.
    main_rows = (n // (8 * _LANES)) * 8
    main_elems = main_rows * _LANES
    tail = n - main_elems

    sum_sq = jnp.float32(0.0)
    sum_ab = jnp.float32(0.0)
    mx = jnp.float32(0.0)

    if main_rows > 0:
        o_main = (o if tail == 0 else o[:main_elems]).reshape(main_rows, _LANES)
        t_main = (t if tail == 0 else t[:main_elems]).reshape(main_rows, _LANES)
        sq_p, ab_p, mx_p = _run_kernel(o_main, t_main, itemsize)
        sum_sq = jnp.sum(sq_p)
        sum_ab = jnp.sum(ab_p)
        mx = jnp.max(mx_p)

    if tail > 0:
        # <=1023 elements: negligible plain-JAX work folded into the partials.
        # TODO(synk): XLA may still materialize the prefix slice when n % 1024
        # != 0; avoiding that would require 1-D blocks or a manual-DMA kernel.
        dt = o[main_elems:].astype(jnp.float32) - t[main_elems:].astype(jnp.float32)
        at = jnp.abs(dt)
        sum_sq = sum_sq + jnp.sum(dt * dt)
        sum_ab = sum_ab + jnp.sum(at)
        mx = jnp.maximum(mx, jnp.max(at))

    inv_n = 1.0 / float(n)
    return 0.5 * sum_sq * inv_n + 0.5 * sum_ab * inv_n + 0.1 * mx


def combined_loss_ref(outputs, targets):
    """Pure-JAX reference mirroring the PyTorch forward."""
    o = outputs.astype(jnp.float32)
    t = targets.astype(jnp.float32)
    d = o - t
    mse = jnp.mean(d * d)
    l1 = jnp.mean(jnp.abs(d))
    return 0.5 * mse + 0.5 * l1 + 0.1 * jnp.max(jnp.abs(d))


if __name__ == "__main__":
    key = jax.random.PRNGKey(0)

    cases = [
        # (shape, dtype): coverage of the different kernel paths.
        ((2, 4, 16, 16), jnp.float32),     # small, single block
        ((2, 16, 80, 80), jnp.float32),    # 1600 rows, one large block
        ((5, 17, 99, 101), jnp.float32),   # multi-block, 2-way split, masked
                                           # last block, <1024-elem wrapper tail
        ((2, 4, 16, 16), jnp.bfloat16),    # low-precision inputs, VMEM upcast
    ]

    for shape, dtype in cases:
        key, k1, k2 = jax.random.split(key, 3)
        outputs = jax.random.normal(k1, shape, dtype=jnp.float32).astype(dtype)
        targets = jax.random.normal(k2, shape, dtype=jnp.float32).astype(dtype)

        loss = jax.block_until_ready(combined_loss(outputs, targets))
        ref = jax.block_until_ready(combined_loss_ref(outputs, targets))
        assert jnp.allclose(loss, ref, rtol=2e-5, atol=1e-5), (shape, dtype, loss, ref)

    print("KERNEL_OK")
</pallas_src>

<mosaic_0001>
module attributes {stable_mosaic.version = 11 : i64} {
  func.func @_combined_loss_kernel(%arg0: i32, %arg1: i32, %arg2: memref<16x128xf32, #tpu.memory_space<vmem>>, %arg3: memref<16x128xf32, #tpu.memory_space<vmem>>, %arg4: memref<1x8x128xf32, #tpu.memory_space<vmem>>, %arg5: memref<1x8x128xf32, #tpu.memory_space<vmem>>, %arg6: memref<1x8x128xf32, #tpu.memory_space<vmem>>) attributes {dimension_semantics = [#tpu.dimension_semantics<parallel>, #tpu.dimension_semantics<arbitrary>], iteration_bounds = array<i64: 1, 1>, scalar_prefetch = 0 : i64, scratch_operands = 0 : i64, tpu.core_type = #tpu.core_type<tc>, window_params = [{transform_indices = @transform_0, window_bounds = array<i64: 16, 128>}, {transform_indices = @transform_1, window_bounds = array<i64: 16, 128>}, {transform_indices = @transform_2, window_bounds = array<i64: 1, 8, 128>}, {transform_indices = @transform_3, window_bounds = array<i64: 1, 8, 128>}, {transform_indices = @transform_4, window_bounds = array<i64: 1, 8, 128>}]} {
    %c0_i32 = arith.constant 0 : i32
    %0 = arith.cmpi eq, %arg1, %c0_i32 : i32
    %1 = arith.extui %0 : i1 to i32
    %c0_i32_0 = arith.constant 0 : i32
    %2 = arith.cmpi ne, %1, %c0_i32_0 : i32
    scf.if %2 {
      %cst_24 = arith.constant 0.000000e+00 : f32
      %25 = vector.broadcast %cst_24 : f32 to vector<1x8x128xf32>
      %c0_25 = arith.constant 0 : index
      %c0_26 = arith.constant 0 : index
      %c0_27 = arith.constant 0 : index
      %26 = vector.load %arg4[%c0_25, %c0_26, %c0_27] : memref<1x8x128xf32, #tpu.memory_space<vmem>>, vector<1x8x128xf32>
      tpu.vector_store %arg4[%c0_25, %c0_26, %c0_27], %25 {strides = array<i32>} : memref<1x8x128xf32, #tpu.memory_space<vmem>>, vector<1x8x128xf32>,
      %cst_28 = arith.constant 0.000000e+00 : f32
      %27 = vector.broadcast %cst_28 : f32 to vector<1x8x128xf32>
      %c0_29 = arith.constant 0 : index
      %c0_30 = arith.constant 0 : index
      %c0_31 = arith.constant 0 : index
      %28 = vector.load %arg5[%c0_29, %c0_30, %c0_31] : memref<1x8x128xf32, #tpu.memory_space<vmem>>, vector<1x8x128xf32>
      tpu.vector_store %arg5[%c0_29, %c0_30, %c0_31], %27 {strides = array<i32>} : memref<1x8x128xf32, #tpu.memory_space<vmem>>, vector<1x8x128xf32>,
      %cst_32 = arith.constant 0.000000e+00 : f32
      %29 = vector.broadcast %cst_32 : f32 to vector<1x8x128xf32>
      %c0_33 = arith.constant 0 : index
      %c0_34 = arith.constant 0 : index
      %c0_35 = arith.constant 0 : index
      %30 = vector.load %arg6[%c0_33, %c0_34, %c0_35] : memref<1x8x128xf32, #tpu.memory_space<vmem>>, vector<1x8x128xf32>
      tpu.vector_store %arg6[%c0_33, %c0_34, %c0_35], %29 {strides = array<i32>} : memref<1x8x128xf32, #tpu.memory_space<vmem>>, vector<1x8x128xf32>,
    } else {
    }
    %c0 = arith.constant 0 : index
    %c0_1 = arith.constant 0 : index
    %3 = vector.load %arg2[%c0, %c0_1] : memref<16x128xf32, #tpu.memory_space<vmem>>, vector<16x128xf32>
    %c0_2 = arith.constant 0 : index
    %c0_3 = arith.constant 0 : index
    %4 = vector.load %arg3[%c0_2, %c0_3] : memref<16x128xf32, #tpu.memory_space<vmem>>, vector<16x128xf32>
    %5 = arith.subf %3, %4 : vector<16x128xf32>
    %6 = math.absf %5 : vector<16x128xf32>
    %7 = arith.mulf %5, %5 : vector<16x128xf32>
    %8 = vector.shape_cast %7 : vector<16x128xf32> to vector<2x8x128xf32>
    %9 = vector.shape_cast %6 : vector<16x128xf32> to vector<2x8x128xf32>
    %c0_4 = arith.constant 0 : index
    %c0_5 = arith.constant 0 : index
    %c0_6 = arith.constant 0 : index
    %10 = vector.load %arg4[%c0_4, %c0_5, %c0_6] : memref<1x8x128xf32, #tpu.memory_space<vmem>>, vector<1x8x128xf32>
    %cst = arith.constant dense<0.000000e+00> : vector<8x128xf32>
    %11 = vector.multi_reduction <add>, %8, %cst [0] : vector<2x8x128xf32> to vector<8x128xf32>
    %12 = vector.shape_cast %11 : vector<8x128xf32> to vector<1x8x128xf32>
    %13 = arith.addf %10, %12 : vector<1x8x128xf32>
    %c0_7 = arith.constant 0 : index
    %c0_8 = arith.constant 0 : index
    %c0_9 = arith.constant 0 : index
    %14 = vector.load %arg4[%c0_7, %c0_8, %c0_9] : memref<1x8x128xf32, #tpu.memory_space<vmem>>, vector<1x8x128xf32>
    tpu.vector_store %arg4[%c0_7, %c0_8, %c0_9], %13 {strides = array<i32>} : memref<1x8x128xf32, #tpu.memory_space<vmem>>, vector<1x8x128xf32>,
    %c0_10 = arith.constant 0 : index
    %c0_11 = arith.constant 0 : index
    %c0_12 = arith.constant 0 : index
    %15 = vector.load %arg5[%c0_10, %c0_11, %c0_12] : memref<1x8x128xf32, #tpu.memory_space<vmem>>, vector<1x8x128xf32>
    %cst_13 = arith.constant dense<0.000000e+00> : vector<8x128xf32>
    %16 = vector.multi_reduction <add>, %9, %cst_13 [0] : vector<2x8x128xf32> to vector<8x128xf32>
    %17 = vector.shape_cast %16 : vector<8x128xf32> to vector<1x8x128xf32>
    %18 = arith.addf %15, %17 : vector<1x8x128xf32>
    %c0_14 = arith.constant 0 : index
    %c0_15 = arith.constant 0 : index
    %c0_16 = arith.constant 0 : index
    %19 = vector.load %arg5[%c0_14, %c0_15, %c0_16] : memref<1x8x128xf32, #tpu.memory_space<vmem>>, vector<1x8x128xf32>
    tpu.vector_store %arg5[%c0_14, %c0_15, %c0_16], %18 {strides = array<i32>} : memref<1x8x128xf32, #tpu.memory_space<vmem>>, vector<1x8x128xf32>,
    %c0_17 = arith.constant 0 : index
    %c0_18 = arith.constant 0 : index
    %c0_19 = arith.constant 0 : index
    %20 = vector.load %arg6[%c0_17, %c0_18, %c0_19] : memref<1x8x128xf32, #tpu.memory_space<vmem>>, vector<1x8x128xf32>
    %cst_20 = arith.constant dense<0xFF800000> : vector<8x128xf32>
    %21 = vector.multi_reduction <maximumf>, %9, %cst_20 [0] : vector<2x8x128xf32> to vector<8x128xf32>
    %22 = vector.shape_cast %21 : vector<8x128xf32> to vector<1x8x128xf32>
    %23 = arith.maximumf %20, %22 : vector<1x8x128xf32>
    %c0_21 = arith.constant 0 : index
    %c0_22 = arith.constant 0 : index
    %c0_23 = arith.constant 0 : index
    %24 = vector.load %arg6[%c0_21, %c0_22, %c0_23] : memref<1x8x128xf32, #tpu.memory_space<vmem>>, vector<1x8x128xf32>
    tpu.vector_store %arg6[%c0_21, %c0_22, %c0_23], %23 {strides = array<i32>} : memref<1x8x128xf32, #tpu.memory_space<vmem>>, vector<1x8x128xf32>,
    return
  }
  func.func @transform_0(%arg0: i32, %arg1: i32) -> (i32, i32) {
    %c1_i32 = arith.constant 1 : i32
    %0 = arith.muli %arg0, %c1_i32 : i32
    %1 = arith.addi %0, %arg1 : i32
    %c0_i32 = arith.constant 0 : i32
    %c0_i32_0 = arith.constant 0 : i32
    return %1, %c0_i32 : i32, i32
  }
  func.func @transform_1(%arg0: i32, %arg1: i32) -> (i32, i32) {
    %c1_i32 = arith.constant 1 : i32
    %0 = arith.muli %arg0, %c1_i32 : i32
    %1 = arith.addi %0, %arg1 : i32
    %c0_i32 = arith.constant 0 : i32
    %c0_i32_0 = arith.constant 0 : i32
    return %1, %c0_i32 : i32, i32
  }
  func.func @transform_2(%arg0: i32, %arg1: i32) -> (i32, i32, i32) {
    %c0_i32 = arith.constant 0 : i32
    %c0_i32_0 = arith.constant 0 : i32
    %c0_i32_1 = arith.constant 0 : i32
    return %arg0, %c0_i32, %c0_i32_0 : i32, i32, i32
  }
  func.func @transform_3(%arg0: i32, %arg1: i32) -> (i32, i32, i32) {
    %c0_i32 = arith.constant 0 : i32
    %c0_i32_0 = arith.constant 0 : i32
    %c0_i32_1 = arith.constant 0 : i32
    return %arg0, %c0_i32, %c0_i32_0 : i32, i32, i32
  }
  func.func @transform_4(%arg0: i32, %arg1: i32) -> (i32, i32, i32) {
    %c0_i32 = arith.constant 0 : i32
    %c0_i32_0 = arith.constant 0 : i32
    %c0_i32_1 = arith.constant 0 : i32
    return %arg0, %c0_i32, %c0_i32_0 : i32, i32, i32
  }
}

</mosaic_0001>

<llo_original>
// kernel: tpu_custom_call.1
$region0: #{tpu_custom_call.1}
  #allocation0 [shape = 'u32[]', space=smem, size = 0x4, offset = 0x4, fixed_abs, tag = 'smem constant byte address 0x4 - core index']
  #allocation1 [shape = 'u32[72,128]{1,0:T(1,128)}', space=vmem, size = 0x9000, scoped, tag = 'internal scratch']
  %s0 = inlined_call_operand.hbm [shape: f32[16,128], index: 0, kind: input, shape index: {}]
  %s1 = inlined_call_operand.hbm [shape: f32[16,128], index: 1, kind: input, shape index: {}]
  %s2 = inlined_call_operand.hbm [shape: f32[1,8,128], index: 2, kind: output, shape index: {0}]
  %s3 = inlined_call_operand.hbm [shape: f32[1,8,128], index: 3, kind: output, shape index: {1}]
  %s4 = inlined_call_operand.hbm [shape: f32[1,8,128], index: 4, kind: output, shape index: {2}]
  %5 = xla_tuple %s2, %s3, %s4
  %s6 = sld [smem:[#allocation0]]
  $region46: #{tpu_custom_call.1} parent=0
    _
  %s8 = ssub.s32 1, %s6
  %s9 = scalar_select 0, %s8, %s6
  $region1: #{tpu_custom_call.1} parent=0
    #allocation2 [shape = 'u8[8192]{0}', space=vmem, size = 0x2000, scoped, tag = 'input window, operand 0, single buffered']
    #allocation3 [shape = 's32[1]{0}', space=sflag, size = 0x4, scoped, tag = 'scoped memory for tpu_custom_call.1']
    #allocation4 [shape = 's32[1]{0}', space=sflag, size = 0x4, scoped, tag = 'scoped memory for tpu_custom_call.1']
    #allocation5 [shape = 'u8[8192]{0}', space=vmem, size = 0x2000, scoped, tag = 'input window, operand 1, single buffered']
    #allocation6 [shape = 's32[1]{0}', space=sflag, size = 0x4, scoped, tag = 'scoped memory for tpu_custom_call.1']
    #allocation7 [shape = 'u8[4096]{0}', space=vmem, size = 0x1000, scoped, tag = 'output window, operand 0, single buffered']
    #allocation8 [shape = 'u8[4096]{0}', space=vmem, size = 0x1000, scoped, tag = 'output window, operand 1, single buffered']
    #allocation9 [shape = 's32[1]{0}', space=sflag, size = 0x4, scoped, tag = 'scoped memory for tpu_custom_call.1']
    #allocation10 [shape = 'u8[4096]{0}', space=vmem, size = 0x1000, scoped, tag = 'output window, operand 2, single buffered']
    %10 = vsyncpa [#allocation3], 0
    %11 = vsyncpa [#allocation6], 0
    %12 = vsyncpa [#allocation4], 0
    %13 = vsyncpa [#allocation9], 0
    // Predicated region
    $region2: #{tpu_custom_call.1} parent=1 // pred_check
      _
    $region3: #{tpu_custom_call.1} parent=1 // pred_check_branch
      %15 = sbr.rel (0) target = $region5
    $region4: #{tpu_custom_call.1} parent=1 // pred_region
      %s16 = sadd.s32 0, 0
      %s17 = smul.u32 2, %s16
      %19 = vsyncadd [#allocation3], 0
      %s20 = smul.addr %s17, 8
      %s21 = scalar_lea.hbm %s0, %s20
      %s22 = sshll.u32 %s21, 4
      %s23 = int_to_ptr.hbm [resolvable:$true] %s22
      %s24 = sshll.u32 [#allocation2], 4
      %s25 = int_to_ptr.vmem [resolvable:$true] %s24
      %30 = dma.hbm_to_vmem [thread:$0]  %s23, 256, %s25, [#allocation3], 128, 128, 8
    $region5: #{tpu_custom_call.1} parent=1 // pred_fallthru
      _
    // Predicated region
    $region6: #{tpu_custom_call.1} parent=1 // pred_check
      _
    $region7: #{tpu_custom_call.1} parent=1 // pred_check_branch
      %32 = sbr.rel (0) target = $region9
    $region8: #{tpu_custom_call.1} parent=1 // pred_region
      %s33 = sadd.s32 0, 0
      %s34 = smul.u32 2, %s33
      %36 = vsyncadd [#allocation6], 0
      %s37 = smul.addr %s34, 8
      %s38 = scalar_lea.hbm %s1, %s37
      %s39 = sshll.u32 %s38, 4
      %s40 = int_to_ptr.hbm [resolvable:$true] %s39
      %s41 = sshll.u32 [#allocation5], 4
      %s42 = int_to_ptr.vmem [resolvable:$true] %s41
      %47 = dma.hbm_to_vmem [thread:$0]  %s40, 256, %s42, [#allocation6], 128, 128, 8
    $region9: #{tpu_custom_call.1} parent=1 // pred_fallthru
      _
    // Predicated region
    $region10: #{tpu_custom_call.1} parent=1 // pred_check
      _
    $region11: #{tpu_custom_call.1} parent=1 // pred_check_branch
      %49 = sbr.rel (0) target = $region13
    $region12: #{tpu_custom_call.1} parent=1 // pred_region
      %51 = dma.done [#allocation3], 256
    $region13: #{tpu_custom_call.1} parent=1 // pred_fallthru
      _
    // Predicated region
    $region14: #{tpu_custom_call.1} parent=1 // pred_check
      _
    $region15: #{tpu_custom_call.1} parent=1 // pred_check_branch
      %53 = sbr.rel (0) target = $region17
    $region16: #{tpu_custom_call.1} parent=1 // pred_region
      %55 = dma.done [#allocation6], 256
    $region17: #{tpu_custom_call.1} parent=1 // pred_fallthru
      _
    %s56 = sadd.s32 0, 0
    %s57 = smul.u32 2, %s56
    %s58 = sadd.s32 0, 0
    %s59 = smul.u32 2, %s58
    %p60 = scmp.eq.s32.totalorder 0, 0
    // Predicated region
    $region18: #{tpu_custom_call.1} parent=1 // pred_check
      %p61 = pneg %p60
    $region19: #{tpu_custom_call.1} parent=1 // pred_check_branch
      %63 = sbr.rel (%p61) target = $region21
    $region20: #{tpu_custom_call.1} parent=1 // pred_region
      %64 = vst [vmem:[#allocation7] sm:$0xff] 0.0
      %65 = vst [vmem:[#allocation8] sm:$0xff] 0.0
      %66 = vst [vmem:[#allocation10] sm:$0xff] 0.0
    $region21: #{tpu_custom_call.1} parent=1 // pred_fallthru
      _
    %v67 = vld [vmem:[#allocation2] sm:$0xff]
    %v68 = vld [vmem:[#allocation2 + $0x8] sm:$0xff]
    %v69 = vld [vmem:[#allocation5] sm:$0xff]
    %v70 = vld [vmem:[#allocation5 + $0x8] sm:$0xff]
    %v71 = vsub.f32 %v67, %v69
    %v72 = vsub.f32 %v68, %v70
    %v73 = vand.u32 2147483647, %v71
    %v74 = vand.u32 2147483647, %v72
    %v75 = vmul.f32 %v71, %v71
    %v76 = vmul.f32 %v72, %v72
    %v77 = vld [vmem:[#allocation7] sm:$0xff]
    %v78 = vadd.f32 %v75, %v76
    %v79 = vadd.f32 %v77, %v78
    %80 = vst [vmem:[#allocation7] sm:$0xff] %v79
    %v81 = vld [vmem:[#allocation8] sm:$0xff]
    %v82 = vadd.f32 %v73, %v74
    %v83 = vadd.f32 %v81, %v82
    %84 = vst [vmem:[#allocation8] sm:$0xff] %v83
    %v85 = vld [vmem:[#allocation10] sm:$0xff]
    %v86 = vmax.f32 %v73, %v74
    %v87 = vmax.f32 %v85, %v86
    %88 = vst [vmem:[#allocation10] sm:$0xff] %v87
    // Predicated region
    $region22: #{tpu_custom_call.1} parent=1 // pred_check
      _
    $region23: #{tpu_custom_call.1} parent=1 // pred_check_branch
      %90 = sbr.rel (0) target = $region25
    $region24: #{tpu_custom_call.1} parent=1 // pred_region
      %92 = vsyncadd [#allocation4], 0
      %s94 = sshll.u32 [#allocation7], 4
      %s95 = int_to_ptr.vmem [resolvable:$true] %s94
      %s96 = sshll.u32 %s2, 4
      %s97 = int_to_ptr.hbm [resolvable:$true] %s96
      %99 = dma.vmem_to_hbm [thread:$0]  %s95, 128, %s97, [#allocation4]
    $region25: #{tpu_custom_call.1} parent=1 // pred_fallthru
      _
    // Predicated region
    $region26: #{tpu_custom_call.1} parent=1 // pred_check
      _
    $region27: #{tpu_custom_call.1} parent=1 // pred_check_branch
      %101 = sbr.rel (0) target = $region29
    $region28: #{tpu_custom_call.1} parent=1 // pred_region
      %103 = vsyncadd [#allocation9], 0
      %s105 = sshll.u32 [#allocation8], 4
      %s106 = int_to_ptr.vmem [resolvable:$true] %s105
      %s107 = sshll.u32 %s3, 4
      %s108 = int_to_ptr.hbm [resolvable:$true] %s107
      %110 = dma.vmem_to_hbm [thread:$0]  %s106, 128, %s108, [#allocation9]
    $region29: #{tpu_custom_call.1} parent=1 // pred_fallthru
      _
    // Predicated region
    $region30: #{tpu_custom_call.1} parent=1 // pred_check
      _
    $region31: #{tpu_custom_call.1} parent=1 // pred_check_branch
      %112 = sbr.rel (0) target = $region33
    $region32: #{tpu_custom_call.1} parent=1 // pred_region
      %114 = vsyncadd [#allocation9], 0
      %s116 = sshll.u32 [#allocation10], 4
      %s117 = int_to_ptr.vmem [resolvable:$true] %s116
      %s118 = sshll.u32 %s4, 4
      %s119 = int_to_ptr.hbm [resolvable:$true] %s118
      %121 = dma.vmem_to_hbm [thread:$0]  %s117, 128, %s119, [#allocation9]
    $region33: #{tpu_custom_call.1} parent=1 // pred_fallthru
      _
    // Predicated region
    $region34: #{tpu_custom_call.1} parent=1 // pred_check
      _
    $region35: #{tpu_custom_call.1} parent=1 // pred_check_branch
      %123 = sbr.rel (0) target = $region37
    $region36: #{tpu_custom_call.1} parent=1 // pred_region
      %125 = dma.done [#allocation4], 128
    $region37: #{tpu_custom_call.1} parent=1 // pred_fallthru
      _
    // Predicated region
    $region38: #{tpu_custom_call.1} parent=1 // pred_check
      _
    $region39: #{tpu_custom_call.1} parent=1 // pred_check_branch
      %127 = sbr.rel (0) target = $region41
    $region40: #{tpu_custom_call.1} parent=1 // pred_region
      %129 = dma.done [#allocation9], 128
    $region41: #{tpu_custom_call.1} parent=1 // pred_fallthru
      _
    // Predicated region
    $region42: #{tpu_custom_call.1} parent=1 // pred_check
      _
    $region43: #{tpu_custom_call.1} parent=1 // pred_check_branch
      %131 = sbr.rel (0) target = $region45
    $region44: #{tpu_custom_call.1} parent=1 // pred_region
      %133 = dma.done [#allocation9], 128
    $region45: #{tpu_custom_call.1} parent=1 // pred_fallthru
      _
    %134 = vsyncpa [#allocation3], 1
    %135 = vsyncpa [#allocation6], 1
    %136 = vsyncpa [#allocation4], 1
    %137 = vsyncpa [#allocation9], 1

</llo_original>
